<compile_context>
chip_gen: v5e
topology: v5e:2x2
jax: 0.10.0
libtpu: 0.0.40
codegen_flags: <defaults>
</compile_context>

<pallas_src>
import math
from functools import partial

import jax
import jax.numpy as jnp
from jax.experimental import pallas as pl
from jax.experimental.pallas import tpu as pltpu

LANE = 128


def round_up(x, m):
    return (x + m - 1) // m * m


def _pad2(a, rows, cols):
    """Zero-pad a 2-D array up to (rows, cols) (no-op if already that shape)."""
    r, c = a.shape
    if r == rows and c == cols:
        return a
    return jnp.zeros((rows, cols), a.dtype).at[:r, :c].set(a)


def _vmem_limit_bytes(frac=0.875, fallback=64 << 20):
    """Per-generation VMEM limit (leave headroom below physical capacity)."""
    try:
        cap = int(pltpu.get_tpu_info().vmem_capacity_bytes)
    except Exception:  # pragma: no cover - conservative fallback (v7x-sized)
        cap = fallback
    return min(120 << 20, max(32 << 20, int(cap * frac)))


# --------------------- Fully fused two-layer kernel ------------------------ #
# Whole graph resident in VMEM (single-buffered): suitable up to a few
# thousand nodes.  For larger graphs use the tiled path below.

def _gcn_fused_kernel(a_ref, x_ref, w1_ref, b1_ref, w2_ref, b2_ref, o_ref, *,
                      agg_dtype):
    a = a_ref[...]  # already agg_dtype (cast once in the wrapper)

    # Layer 1 feature transform, computed ONCE for the whole graph (MXU).
    xw1 = jnp.dot(x_ref[...], w1_ref[...], preferred_element_type=jnp.float32)
    # Layer 1 aggregation; bias add + ReLU stay in f32 (v5e: no bf16 VPU).
    h = jnp.dot(a, xw1.astype(agg_dtype), preferred_element_type=jnp.float32)
    h = jnp.maximum(h + b1_ref[...], 0.0)

    # Layer 2 feature transform + aggregation + bias.
    hw2 = jnp.dot(h, w2_ref[...], preferred_element_type=jnp.float32)
    out = jnp.dot(a, hw2.astype(agg_dtype), preferred_element_type=jnp.float32)
    o_ref[...] = (out + b2_ref[...]).astype(o_ref.dtype)


def gcn_forward_fused(a_hat, x, params, *, agg_dtype=jnp.bfloat16):
    """Two-layer GCN in a single pallas_call (graph must fit in VMEM)."""
    n = a_hat.shape[0]
    f_in = x.shape[1]
    h_feats = params["w1"].shape[1]
    num_classes = params["w2"].shape[1]

    # Lane-dense padding of the narrow feature/class dims (zeros in padded
    # weight columns / bias entries -> sliced result is unchanged).
    f_in_p = round_up(f_in, LANE)
    h_p = round_up(h_feats, LANE)
    c_p = round_up(num_classes, LANE)

    x_p = _pad2(x, n, f_in_p)
    w1_p = _pad2(params["w1"], f_in_p, h_p)
    b1_p = _pad2(params["b1"], 1, h_p)
    w2_p = _pad2(params["w2"], h_p, c_p)
    b2_p = _pad2(params["b2"], 1, c_p)

    # Whole-array VMEM residency, single buffered (nothing to pipeline with a
    # single invocation - avoids the default 2x double-buffer VMEM cost).
    vspec = pl.BlockSpec(memory_space=pltpu.MemorySpace.VMEM)
    kernel = partial(_gcn_fused_kernel, agg_dtype=agg_dtype)
    out = pl.pallas_call(
        kernel,
        out_shape=jax.ShapeDtypeStruct((n, c_p), x.dtype),
        in_specs=[vspec] * 6,
        out_specs=vspec,
        compiler_params=pltpu.CompilerParams(
            vmem_limit_bytes=_vmem_limit_bytes()),
    )(a_hat.astype(agg_dtype), x_p, w1_p, b1_p, w2_p, b2_p)
    return out[:, :num_classes]


# ------------------ Scalable tiled aggregation kernel ---------------------- #
# out[tile_i] = sum_k A[tile_i, tile_k] @ XW[tile_k]  (+ bias, optional ReLU)

def _agg_kernel(a_ref, xw_ref, b_ref, o_ref, acc_ref, *, apply_relu):
    k = pl.program_id(1)

    @pl.when(k == 0)
    def _():
        acc_ref[...] = jnp.zeros_like(acc_ref)

    acc_ref[...] += jnp.dot(a_ref[...], xw_ref[...],
                            preferred_element_type=jnp.float32)

    @pl.when(k == pl.num_programs(1) - 1)
    def _():
        h = acc_ref[...] + b_ref[...]          # f32 epilogue
        if apply_relu:
            h = jnp.maximum(h, 0.0)
        o_ref[...] = h.astype(o_ref.dtype)


def _gcn_layer_tiled(a_p, xw_p, b_p, *, apply_relu, tile_n, tile_k):
    """One aggregation layer over an already-padded A (n_pad x n_pad)."""
    n_pad = a_p.shape[0]
    f_out = xw_p.shape[1]        # already lane-dense (multiple of 128)
    return pl.pallas_call(
        partial(_agg_kernel, apply_relu=apply_relu),
        out_shape=jax.ShapeDtypeStruct((n_pad, f_out), jnp.float32),
        grid=(n_pad // tile_n, n_pad // tile_k),
        in_specs=[
            pl.BlockSpec((tile_n, tile_k), lambda i, k: (i, k)),  # A tile
            pl.BlockSpec((tile_k, f_out), lambda i, k: (k, 0)),   # XW tile
            pl.BlockSpec((1, f_out), lambda i, k: (0, 0)),        # bias
        ],
        out_specs=pl.BlockSpec((tile_n, f_out), lambda i, k: (i, 0)),
        scratch_shapes=[pltpu.VMEM((tile_n, f_out), jnp.float32)],
        compiler_params=pltpu.CompilerParams(
            dimension_semantics=("parallel", "arbitrary"),
            vmem_limit_bytes=_vmem_limit_bytes()),
    )(a_p, xw_p, b_p)


def gcn_forward_tiled(a_hat, x, params, *, agg_dtype=jnp.bfloat16,
                      tile_n=256, tile_k=1024):
    """Two-layer GCN with row/K-tiled aggregation (for graphs too large for
    the fused path).  A_hat is cast/padded at most ONCE and reused by both
    layers; the hidden activation stays at the padded row count throughout.
    """
    n = a_hat.shape[0]
    f_in = x.shape[1]
    h_feats = params["w1"].shape[1]
    num_classes = params["w2"].shape[1]
    h_p = round_up(h_feats, LANE)
    c_p = round_up(num_classes, LANE)

    # Clamp tiles to the (128-aligned) graph size, then pad N so both tile
    # sizes divide it.  When they already divide N there is no padded copy.
    n128 = round_up(n, LANE)
    tile_n = min(tile_n, n128)
    tile_k = min(tile_k, n128)
    n_pad = round_up(n, math.lcm(tile_n, tile_k))

    a_p = a_hat.astype(agg_dtype)
    if n_pad != n:
        a_p = jnp.zeros((n_pad, n_pad), agg_dtype).at[:n, :n].set(a_p)
    x_p = _pad2(x, n_pad, f_in)

    w1_p = _pad2(params["w1"], f_in, h_p)
    b1_p = _pad2(params["b1"], 1, h_p)
    w2_p = _pad2(params["w2"], h_p, c_p)
    b2_p = _pad2(params["b2"], 1, c_p)

    # Layer 1: feature transform hoisted (tiny matmul), tiled aggregation.
    xw1 = (x_p @ w1_p).astype(agg_dtype)
    h = _gcn_layer_tiled(a_p, xw1, b1_p, apply_relu=True,
                         tile_n=tile_n, tile_k=tile_k)

    # Layer 2.  Padded A columns are zero, so the (bias-only) padded rows of h
    # never contribute to real outputs; padded rows/cols are sliced off below.
    hw2 = (h @ w2_p).astype(agg_dtype)
    out = _gcn_layer_tiled(a_p, hw2, b2_p, apply_relu=False,
                           tile_n=tile_n, tile_k=tile_k)
    return out[:n, :num_classes]


# --------------------------- Param / graph setup ---------------------------- #

def glorot_uniform(key, shape, dtype=jnp.float32):
    fan_in, fan_out = shape
    limit = jnp.sqrt(6.0 / (fan_in + fan_out))
    return jax.random.uniform(key, shape, dtype, minval=-limit, maxval=limit)


def make_params(key, in_feats, h_feats, num_classes):
    k1, k2 = jax.random.split(key)
    return {
        "w1": glorot_uniform(k1, (in_feats, h_feats)),
        "b1": jnp.zeros((1, h_feats), jnp.float32),
        "w2": glorot_uniform(k2, (h_feats, num_classes)),
        "b2": jnp.zeros((1, num_classes), jnp.float32),
    }


def make_normalized_adjacency(key, n):
    """Random undirected graph (+ self loops) with symmetric normalization."""
    logits = jax.random.uniform(key, (n, n))
    adj = (logits > 0.9).astype(jnp.float32)
    adj = jnp.maximum(adj, adj.T)                           # symmetrize
    adj = jnp.maximum(adj, jnp.eye(n, dtype=jnp.float32))   # self loops
    deg = adj.sum(axis=1)
    d_inv_sqrt = 1.0 / jnp.sqrt(deg)
    return adj * d_inv_sqrt[:, None] * d_inv_sqrt[None, :]


# ---------------------------------- main ------------------------------------ #

if __name__ == "__main__":
    N = 256
    IN_FEATS = 32
    H_FEATS = 16
    NUM_CLASSES = 2

    key = jax.random.PRNGKey(0)
    k_graph, k_feat, k_param = jax.random.split(key, 3)

    a_hat = make_normalized_adjacency(k_graph, N)
    x = jax.random.normal(k_feat, (N, IN_FEATS), jnp.float32)
    params = make_params(k_param, IN_FEATS, H_FEATS, NUM_CLASSES)

    # Pure-JAX reference of the same math.
    h_ref = jnp.maximum(a_hat @ (x @ params["w1"]) + params["b1"], 0.0)
    out_ref = a_hat @ (h_ref @ params["w2"]) + params["b2"]

    # 1) Fused single-launch kernel, exact f32 aggregation.
    out_f32 = jax.block_until_ready(
        gcn_forward_fused(a_hat, x, params, agg_dtype=jnp.float32))
    assert out_f32.shape == (N, NUM_CLASSES)
    assert jnp.allclose(out_f32, out_ref, atol=1e-3, rtol=1e-3)

    # 2) Fused kernel, production default (bf16 A_hat aggregation operands).
    out_fused = jax.block_until_ready(gcn_forward_fused(a_hat, x, params))
    assert out_fused.shape == (N, NUM_CLASSES)
    assert jnp.allclose(out_fused, out_ref, atol=5e-2, rtol=5e-2)

    # 3) Scalable tiled path, exact f32 aggregation.
    out_tiled_f32 = jax.block_until_ready(
        gcn_forward_tiled(a_hat, x, params, agg_dtype=jnp.float32))
    assert out_tiled_f32.shape == (N, NUM_CLASSES)
    assert jnp.allclose(out_tiled_f32, out_ref, atol=1e-3, rtol=1e-3)

    # 4) Scalable tiled path, production default (bf16).
    out_tiled = jax.block_until_ready(gcn_forward_tiled(a_hat, x, params))
    assert out_tiled.shape == (N, NUM_CLASSES)
    assert jnp.allclose(out_tiled, out_ref, atol=5e-2, rtol=5e-2)

    print("KERNEL_OK")
</pallas_src>

<mosaic_0001>
module attributes {stable_mosaic.version = 11 : i64} {
  func.func @_gcn_fused_kernel(%arg0: memref<256x256xf32, #tpu.memory_space<vmem>>, %arg1: memref<256x128xf32, #tpu.memory_space<vmem>>, %arg2: memref<128x128xf32, #tpu.memory_space<vmem>>, %arg3: memref<1x128xf32, #tpu.memory_space<vmem>>, %arg4: memref<128x128xf32, #tpu.memory_space<vmem>>, %arg5: memref<1x128xf32, #tpu.memory_space<vmem>>, %arg6: memref<256x128xf32, #tpu.memory_space<vmem>>) attributes {dimension_semantics = [], scalar_prefetch = 0 : i64, scratch_operands = 0 : i64, tpu.core_type = #tpu.core_type<tc>} {
    %c0 = arith.constant 0 : index
    %c0_0 = arith.constant 0 : index
    %0 = vector.load %arg0[%c0, %c0_0] : memref<256x256xf32, #tpu.memory_space<vmem>>, vector<256x256xf32>
    %c0_1 = arith.constant 0 : index
    %c0_2 = arith.constant 0 : index
    %1 = vector.load %arg1[%c0_1, %c0_2] : memref<256x128xf32, #tpu.memory_space<vmem>>, vector<256x128xf32>
    %c0_3 = arith.constant 0 : index
    %c0_4 = arith.constant 0 : index
    %2 = vector.load %arg2[%c0_3, %c0_4] : memref<128x128xf32, #tpu.memory_space<vmem>>, vector<128x128xf32>
    %cst = arith.constant dense<0.000000e+00> : vector<256x128xf32>
    %3 = tpu.matmul %1, %2, %cst {dimension_numbers = #tpu.dot_dimension_numbers<[1], [0], [0], [1], [0, 0, 1, 1], [], []>} : vector<256x128xf32>, vector<128x128xf32>, vector<256x128xf32> -> vector<256x128xf32>
    %cst_5 = arith.constant dense<0.000000e+00> : vector<256x128xf32>
    %4 = tpu.matmul %0, %3, %cst_5 {dimension_numbers = #tpu.dot_dimension_numbers<[1], [0], [0], [1], [0, 0, 1, 1], [], []>} : vector<256x256xf32>, vector<256x128xf32>, vector<256x128xf32> -> vector<256x128xf32>
    %c0_6 = arith.constant 0 : index
    %c0_7 = arith.constant 0 : index
    %5 = vector.load %arg3[%c0_6, %c0_7] : memref<1x128xf32, #tpu.memory_space<vmem>>, vector<1x128xf32>
    %6 = vector.broadcast %5 : vector<1x128xf32> to vector<256x128xf32>
    %7 = arith.addf %4, %6 : vector<256x128xf32>
    %cst_8 = arith.constant 0.000000e+00 : f32
    %8 = vector.broadcast %cst_8 : f32 to vector<256x128xf32>
    %9 = arith.maximumf %7, %8 : vector<256x128xf32>
    %c0_9 = arith.constant 0 : index
    %c0_10 = arith.constant 0 : index
    %10 = vector.load %arg4[%c0_9, %c0_10] : memref<128x128xf32, #tpu.memory_space<vmem>>, vector<128x128xf32>
    %cst_11 = arith.constant dense<0.000000e+00> : vector<256x128xf32>
    %11 = tpu.matmul %9, %10, %cst_11 {dimension_numbers = #tpu.dot_dimension_numbers<[1], [0], [0], [1], [0, 0, 1, 1], [], []>} : vector<256x128xf32>, vector<128x128xf32>, vector<256x128xf32> -> vector<256x128xf32>
    %cst_12 = arith.constant dense<0.000000e+00> : vector<256x128xf32>
    %12 = tpu.matmul %0, %11, %cst_12 {dimension_numbers = #tpu.dot_dimension_numbers<[1], [0], [0], [1], [0, 0, 1, 1], [], []>} : vector<256x256xf32>, vector<256x128xf32>, vector<256x128xf32> -> vector<256x128xf32>
    %c0_13 = arith.constant 0 : index
    %c0_14 = arith.constant 0 : index
    %13 = vector.load %arg5[%c0_13, %c0_14] : memref<1x128xf32, #tpu.memory_space<vmem>>, vector<1x128xf32>
    %14 = vector.broadcast %13 : vector<1x128xf32> to vector<256x128xf32>
    %15 = arith.addf %12, %14 : vector<256x128xf32>
    %c0_15 = arith.constant 0 : index
    %c0_16 = arith.constant 0 : index
    %16 = vector.load %arg6[%c0_15, %c0_16] : memref<256x128xf32, #tpu.memory_space<vmem>>, vector<256x128xf32>
    tpu.vector_store %arg6[%c0_15, %c0_16], %15 {strides = array<i32>} : memref<256x128xf32, #tpu.memory_space<vmem>>, vector<256x128xf32>,
    return
  }
}

</mosaic_0001>

<llo_original>
// kernel: tpu_custom_call.1
$region0: #{tpu_custom_call.1}
  #allocation0 [shape = 'u32[]', space=smem, size = 0x4, offset = 0x4, fixed_abs, tag = 'smem constant byte address 0x4 - core index']
  #allocation1 [shape = 'u32[72,128]{1,0:T(1,128)}', space=vmem, size = 0x9000, scoped, tag = 'internal scratch']
  %s0 = inlined_call_operand.hbm [shape: f32[256,256], index: 0, kind: input, shape index: {}]
  %s1 = inlined_call_operand.hbm [shape: f32[256,128], index: 1, kind: input, shape index: {}]
  %s2 = inlined_call_operand.hbm [shape: f32[128,128], index: 2, kind: input, shape index: {}]
  %s3 = inlined_call_operand.vmem [shape: f32[1,128], index: 3, kind: input, shape index: {}]
  %s4 = inlined_call_operand.hbm [shape: f32[128,128], index: 4, kind: input, shape index: {}]
  %s5 = inlined_call_operand.vmem [shape: f32[1,128], index: 5, kind: input, shape index: {}]
  %s6 = inlined_call_operand.hbm [shape: f32[256,128], index: 6, kind: output, shape index: {}]
  %s7 = sld [smem:[#allocation0]]
  $region50: #{tpu_custom_call.1} parent=0
    _
  %s9 = ssub.s32 1, %s7
  %s10 = scalar_select 0, %s9, %s7
  $region1: #{tpu_custom_call.1} parent=0
    #allocation2 [shape = 'u8[262144]{0}', space=vmem, size = 0x40000, scoped, tag = 'input window, operand 0, single buffered']
    #allocation3 [shape = 's32[1]{0}', space=sflag, size = 0x4, scoped, tag = 'scoped memory for tpu_custom_call.1']
    #allocation4 [shape = 's32[1]{0}', space=sflag, size = 0x4, scoped, tag = 'scoped memory for tpu_custom_call.1']
    #allocation5 [shape = 'u8[131072]{0}', space=vmem, size = 0x20000, scoped, tag = 'input window, operand 1, single buffered']
    #allocation6 [shape = 's32[1]{0}', space=sflag, size = 0x4, scoped, tag = 'scoped memory for tpu_custom_call.1']
    #allocation7 [shape = 'u8[65536]{0}', space=vmem, size = 0x10000, scoped, tag = 'input window, operand 2, single buffered']
    #allocation8 [shape = 'u8[65536]{0}', space=vmem, size = 0x10000, scoped, tag = 'input window, operand 4, single buffered']
    #allocation9 [shape = 's32[1]{0}', space=sflag, size = 0x4, scoped, tag = 'scoped memory for tpu_custom_call.1']
    #allocation10 [shape = 'u8[131072]{0}', space=vmem, size = 0x20000, scoped, tag = 'output window, operand 0, single buffered']
    %11 = vsyncpa [#allocation3], 0
    %12 = vsyncpa [#allocation6], 0
    %13 = vsyncpa [#allocation9], 0
    %14 = vsyncpa [#allocation4], 0
    // Predicated region
    $region2: #{tpu_custom_call.1} parent=1 // pred_check
      _
    $region3: #{tpu_custom_call.1} parent=1 // pred_check_branch
      %16 = sbr.rel (0) target = $region5
    $region4: #{tpu_custom_call.1} parent=1 // pred_region
      %18 = vsyncadd [#allocation3], 0
      %s19 = sshll.u32 %s0, 4
      %s20 = int_to_ptr.hbm [resolvable:$true] %s19
      %s21 = sshll.u32 [#allocation2], 4
      %s22 = int_to_ptr.vmem [resolvable:$true] %s21
      %27 = dma.hbm_to_vmem [thread:$0]  %s20, 8192, %s22, [#allocation3], 256, 256, 16
    $region5: #{tpu_custom_call.1} parent=1 // pred_fallthru
      _
    // Predicated region
    $region6: #{tpu_custom_call.1} parent=1 // pred_check
      _
    $region7: #{tpu_custom_call.1} parent=1 // pred_check_branch
      %29 = sbr.rel (0) target = $region9
    $region8: #{tpu_custom_call.1} parent=1 // pred_region
      %31 = vsyncadd [#allocation6], 0
      %s32 = sshll.u32 %s1, 4
      %s33 = int_to_ptr.hbm [resolvable:$true] %s32
      %s34 = sshll.u32 [#allocation5], 4
      %s35 = int_to_ptr.vmem [resolvable:$true] %s34
      %40 = dma.hbm_to_vmem [thread:$0]  %s33, 4096, %s35, [#allocation6], 128, 128, 8
    $region9: #{tpu_custom_call.1} parent=1 // pred_fallthru
      _
    // Predicated region
    $region10: #{tpu_custom_call.1} parent=1 // pred_check
      _
    $region11: #{tpu_custom_call.1} parent=1 // pred_check_branch
      %42 = sbr.rel (0) target = $region13
    $region12: #{tpu_custom_call.1} parent=1 // pred_region
      %44 = vsyncadd [#allocation6], 0
      %s45 = sshll.u32 %s2, 4
      %s46 = int_to_ptr.hbm [resolvable:$true] %s45
      %s47 = sshll.u32 [#allocation7], 4
      %s48 = int_to_ptr.vmem [resolvable:$true] %s47
      %53 = dma.hbm_to_vmem [thread:$0]  %s46, 2048, %s48, [#allocation6], 128, 128, 8
    $region13: #{tpu_custom_call.1} parent=1 // pred_fallthru
      _
    // Predicated region
    $region14: #{tpu_custom_call.1} parent=1 // pred_check
      _
    $region15: #{tpu_custom_call.1} parent=1 // pred_check_branch
      %55 = sbr.rel (0) target = $region17
    $region16: #{tpu_custom_call.1} parent=1 // pred_region
      _
    $region17: #{tpu_custom_call.1} parent=1 // pred_fallthru
      _
    // Predicated region
    $region18: #{tpu_custom_call.1} parent=1 // pred_check
      _
    $region19: #{tpu_custom_call.1} parent=1 // pred_check_branch
      %57 = sbr.rel (0) target = $region21
    $region20: #{tpu_custom_call.1} parent=1 // pred_region
      %59 = vsyncadd [#allocation9], 0
      %s60 = sshll.u32 %s4, 4
      %s61 = int_to_ptr.hbm [resolvable:$true] %s60
      %s62 = sshll.u32 [#allocation8], 4
      %s63 = int_to_ptr.vmem [resolvable:$true] %s62
      %68 = dma.hbm_to_vmem [thread:$0]  %s61, 2048, %s63, [#allocation9], 128, 128, 8
    $region21: #{tpu_custom_call.1} parent=1 // pred_fallthru
      _
    // Predicated region
    $region22: #{tpu_custom_call.1} parent=1 // pred_check
      _
    $region23: #{tpu_custom_call.1} parent=1 // pred_check_branch
      %70 = sbr.rel (0) target = $region25
    $region24: #{tpu_custom_call.1} parent=1 // pred_region
      _
    $region25: #{tpu_custom_call.1} parent=1 // pred_fallthru
      _
    // Predicated region
    $region26: #{tpu_custom_call.1} parent=1 // pred_check
      _
    $region27: #{tpu_custom_call.1} parent=1 // pred_check_branch
      %72 = sbr.rel (0) target = $region29
    $region28: #{tpu_custom_call.1} parent=1 // pred_region
      %74 = dma.done [#allocation3], 8192
    $region29: #{tpu_custom_call.1} parent=1 // pred_fallthru
      _
    // Predicated region
    $region30: #{tpu_custom_call.1} parent=1 // pred_check
      _
    $region31: #{tpu_custom_call.1} parent=1 // pred_check_branch
      %76 = sbr.rel (0) target = $region33
    $region32: #{tpu_custom_call.1} parent=1 // pred_region
      %78 = dma.done [#allocation6], 4096
    $region33: #{tpu_custom_call.1} parent=1 // pred_fallthru
      _
    // Predicated region
    $region34: #{tpu_custom_call.1} parent=1 // pred_check
      _
    $region35: #{tpu_custom_call.1} parent=1 // pred_check_branch
      %80 = sbr.rel (0) target = $region37
    $region36: #{tpu_custom_call.1} parent=1 // pred_region
      %82 = dma.done [#allocation6], 2048
    $region37: #{tpu_custom_call.1} parent=1 // pred_fallthru
      _
    // Predicated region
    $region38: #{tpu_custom_call.1} parent=1 // pred_check
      _
    $region39: #{tpu_custom_call.1} parent=1 // pred_check_branch
      %84 = sbr.rel (0) target = $region41
    $region40: #{tpu_custom_call.1} parent=1 // pred_region
      %86 = dma.done [#allocation9], 2048
    $region41: #{tpu_custom_call.1} parent=1 // pred_fallthru
      _
    %v87 = vld [vmem:[#allocation2] sm:$0xff]
    %v88 = vld [vmem:[#allocation2 + $0x8] sm:$0xff]
    %v89 = vld [vmem:[#allocation2 + $0x10] sm:$0xff]
    %v90 = vld [vmem:[#allocation2 + $0x18] sm:$0xff]
    %v91 = vld [vmem:[#allocation2 + $0x20] sm:$0xff]
    %v92 = vld [vmem:[#allocation2 + $0x28] sm:$0xff]
    %v93 = vld [vmem:[#allocation2 + $0x30] sm:$0xff]
    %v94 = vld [vmem:[#allocation2 + $0x38] sm:$0xff]
    %v95 = vld [vmem:[#allocation2 + $0x40] sm:$0xff]
    %v96 = vld [vmem:[#allocation2 + $0x48] sm:$0xff]
    %v97 = vld [vmem:[#allocation2 + $0x50] sm:$0xff]
    %v98 = vld [vmem:[#allocation2 + $0x58] sm:$0xff]
    %v99 = vld [vmem:[#allocation2 + $0x60] sm:$0xff]
    %v100 = vld [vmem:[#allocation2 + $0x68] sm:$0xff]
    %v101 = vld [vmem:[#allocation2 + $0x70] sm:$0xff]
    %v102 = vld [vmem:[#allocation2 + $0x78] sm:$0xff]
    %v103 = vld [vmem:[#allocation2 + $0x80] sm:$0xff]
    %v104 = vld [vmem:[#allocation2 + $0x88] sm:$0xff]
    %v105 = vld [vmem:[#allocation2 + $0x90] sm:$0xff]
    %v106 = vld [vmem:[#allocation2 + $0x98] sm:$0xff]
    %v107 = vld [vmem:[#allocation2 + $0xa0] sm:$0xff]
    %v108 = vld [vmem:[#allocation2 + $0xa8] sm:$0xff]
    %v109 = vld [vmem:[#allocation2 + $0xb0] sm:$0xff]
    %v110 = vld [vmem:[#allocation2 + $0xb8] sm:$0xff]
    %v111 = vld [vmem:[#allocation2 + $0xc0] sm:$0xff]
    %v112 = vld [vmem:[#allocation2 + $0xc8] sm:$0xff]
    %v113 = vld [vmem:[#allocation2 + $0xd0] sm:$0xff]
    %v114 = vld [vmem:[#allocation2 + $0xd8] sm:$0xff]
    %v115 = vld [vmem:[#allocation2 + $0xe0] sm:$0xff]
    %v116 = vld [vmem:[#allocation2 + $0xe8] sm:$0xff]
    %v117 = vld [vmem:[#allocation2 + $0xf0] sm:$0xff]
    %v118 = vld [vmem:[#allocation2 + $0xf8] sm:$0xff]
    %v119 = vld [vmem:[#allocation2 + $0x100] sm:$0xff]
    %v120 = vld [vmem:[#allocation2 + $0x108] sm:$0xff]
    %v121 = vld [vmem:[#allocation2 + $0x110] sm:$0xff]
    %v122 = vld [vmem:[#allocation2 + $0x118] sm:$0xff]
    %v123 = vld [vmem:[#allocation2 + $0x120] sm:$0xff]
    %v124 = vld [vmem:[#allocation2 + $0x128] sm:$0xff]
    %v125 = vld [vmem:[#allocation2 + $0x130] sm:$0xff]
    %v126 = vld [vmem:[#allocation2 + $0x138] sm:$0xff]
    %v127 = vld [vmem:[#allocation2 + $0x140] sm:$0xff]
    %v128 = vld [vmem:[#allocation2 + $0x148] sm:$0xff]
    %v129 = vld [vmem:[#allocation2 + $0x150] sm:$0xff]
    %v130 = vld [vmem:[#allocation2 + $0x158] sm:$0xff]
    %v131 = vld [vmem:[#allocation2 + $0x160] sm:$0xff]
    %v132 = vld [vmem:[#allocation2 + $0x168] sm:$0xff]
    %v133 = vld [vmem:[#allocation2 + $0x170] sm:$0xff]
    %v134 = vld [vmem:[#allocation2 + $0x178] sm:$0xff]
    %v135 = vld [vmem:[#allocation2 + $0x180] sm:$0xff]
    %v136 = vld [vmem:[#allocation2 + $0x188] sm:$0xff]
    %v137 = vld [vmem:[#allocation2 + $0x190] sm:$0xff]
    %v138 = vld [vmem:[#allocation2 + $0x198] sm:$0xff]
    %v139 = vld [vmem:[#allocation2 + $0x1a0] sm:$0xff]
    %v140 = vld [vmem:[#allocation2 + $0x1a8] sm:$0xff]
    %v141 = vld [vmem:[#allocation2 + $0x1b0] sm:$0xff]
    %v142 = vld [vmem:[#allocation2 + $0x1b8] sm:$0xff]
    %v143 = vld [vmem:[#allocation2 + $0x1c0] sm:$0xff]
    %v144 = vld [vmem:[#allocation2 + $0x1c8] sm:$0xff]
    %v145 = vld [vmem:[#allocation2 + $0x1d0] sm:$0xff]
    %v146 = vld [vmem:[#allocation2 + $0x1d8] sm:$0xff]
    %v147 = vld [vmem:[#allocation2 + $0x1e0] sm:$0xff]
    %v148 = vld [vmem:[#allocation2 + $0x1e8] sm:$0xff]
    %v149 = vld [vmem:[#allocation2 + $0x1f0] sm:$0xff]
    %v150 = vld [vmem:[#allocation2 + $0x1f8] sm:$0xff]
    %v151 = vld [vmem:[#allocation5] sm:$0xff]
    %v152 = vld [vmem:[#allocation5 + $0x8] sm:$0xff]
    %v153 = vld [vmem:[#allocation5 + $0x10] sm:$0xff]
    %v154 = vld [vmem:[#allocation5 + $0x18] sm:$0xff]
    %v155 = vld [vmem:[#allocation5 + $0x20] sm:$0xff]
    %v156 = vld [vmem:[#allocation5 + $0x28] sm:$0xff]
    %v157 = vld [vmem:[#allocation5 + $0x30] sm:$0xff]
    %v158 = vld [vmem:[#allocation5 + $0x38] sm:$0xff]
    %v159 = vld [vmem:[#allocation5 + $0x40] sm:$0xff]
    %v160 = vld [vmem:[#allocation5 + $0x48] sm:$0xff]
    %v161 = vld [vmem:[#allocation5 + $0x50] sm:$0xff]
    %v162 = vld [vmem:[#allocation5 + $0x58] sm:$0xff]
    %v163 = vld [vmem:[#allocation5 + $0x60] sm:$0xff]
    %v164 = vld [vmem:[#allocation5 + $0x68] sm:$0xff]
    %v165 = vld [vmem:[#allocation5 + $0x70] sm:$0xff]
    %v166 = vld [vmem:[#allocation5 + $0x78] sm:$0xff]
    %v167 = vld [vmem:[#allocation5 + $0x80] sm:$0xff]
    %v168 = vld [vmem:[#allocation5 + $0x88] sm:$0xff]
    %v169 = vld [vmem:[#allocation5 + $0x90] sm:$0xff]
    %v170 = vld [vmem:[#allocation5 + $0x98] sm:$0xff]
    %v171 = vld [vmem:[#allocation5 + $0xa0] sm:$0xff]
    %v172 = vld [vmem:[#allocation5 + $0xa8] sm:$0xff]
    %v173 = vld [vmem:[#allocation5 + $0xb0] sm:$0xff]
    %v174 = vld [vmem:[#allocation5 + $0xb8] sm:$0xff]
    %v175 = vld [vmem:[#allocation5 + $0xc0] sm:$0xff]
    %v176 = vld [vmem:[#allocation5 + $0xc8] sm:$0xff]
    %v177 = vld [vmem:[#allocation5 + $0xd0] sm:$0xff]
    %v178 = vld [vmem:[#allocation5 + $0xd8] sm:$0xff]
    %v179 = vld [vmem:[#allocation5 + $0xe0] sm:$0xff]
    %v180 = vld [vmem:[#allocation5 + $0xe8] sm:$0xff]
    %v181 = vld [vmem:[#allocation5 + $0xf0] sm:$0xff]
    %v182 = vld [vmem:[#allocation5 + $0xf8] sm:$0xff]
    %v183 = vld [vmem:[#allocation7] sm:$0xff]
    %v184 = vld [vmem:[#allocation7 + $0x8] sm:$0xff]
    %v185 = vld [vmem:[#allocation7 + $0x10] sm:$0xff]
    %v186 = vld [vmem:[#allocation7 + $0x18] sm:$0xff]
    %v187 = vld [vmem:[#allocation7 + $0x20] sm:$0xff]
    %v188 = vld [vmem:[#allocation7 + $0x28] sm:$0xff]
    %v189 = vld [vmem:[#allocation7 + $0x30] sm:$0xff]
    %v190 = vld [vmem:[#allocation7 + $0x38] sm:$0xff]
    %v191 = vld [vmem:[#allocation7 + $0x40] sm:$0xff]
    %v192 = vld [vmem:[#allocation7 + $0x48] sm:$0xff]
    %v193 = vld [vmem:[#allocation7 + $0x50] sm:$0xff]
    %v194 = vld [vmem:[#allocation7 + $0x58] sm:$0xff]
    %v195 = vld [vmem:[#allocation7 + $0x60] sm:$0xff]
    %v196 = vld [vmem:[#allocation7 + $0x68] sm:$0xff]
    %v197 = vld [vmem:[#allocation7 + $0x70] sm:$0xff]
    %v198 = vld [vmem:[#allocation7 + $0x78] sm:$0xff]
    %199 = vmatpush.msra.mxu0 %v198
    %200 = vmatpush.msra.mxu0 %v197
    %201 = vmatpush.msra.mxu0 %v196
    %202 = vmatpush.msra.mxu0 %v195
    %203 = vmatpush.msra.mxu0 %v194
    %204 = vmatpush.msra.mxu0 %v193
    %205 = vmatpush.msra.mxu0 %v192
    %206 = vmatpush.msra.mxu0 %v191
    %207 = vmatpush.msra.mxu0 %v190
    %208 = vmatpush.msra.mxu0 %v189
    %209 = vmatpush.msra.mxu0 %v188
    %210 = vmatpush.msra.mxu0 %v187
    %211 = vmatpush.msra.mxu0 %v186
    %212 = vmatpush.msra.mxu0 %v185
    %213 = vmatpush.msra.mxu0 %v184
    %214 = vmatpush.msra.mxu0 %v183
    %215 = vmatmul.f32.gmra.mxu0 %v151
    %v216 = vpop.f32.mrf.mxu0
    %v217 = vadd.f32 0.0, %v216
    %218 = vmatmul.f32.gmra.mxu0 %v152
    %v219 = vpop.f32.mrf.mxu0
    %v220 = vadd.f32 0.0, %v219
    %221 = vmatmul.f32.gmra.mxu0 %v153
    %v222 = vpop.f32.mrf.mxu0
    %v223 = vadd.f32 0.0, %v222
    %224 = vmatmul.f32.gmra.mxu0 %v154
    %v225 = vpop.f32.mrf.mxu0
    %v226 = vadd.f32 0.0, %v225
    %227 = vmatmul.f32.gmra.mxu0 %v155
    %v228 = vpop.f32.mrf.mxu0
    %v229 = vadd.f32 0.0, %v228
    %230 = vmatmul.f32.gmra.mxu0 %v156
    %v231 = vpop.f32.mrf.mxu0
    %v232 = vadd.f32 0.0, %v231
    %233 = vmatmul.f32.gmra.mxu0 %v157
    %v234 = vpop.f32.mrf.mxu0
    %v235 = vadd.f32 0.0, %v234
    %236 = vmatmul.f32.gmra.mxu0 %v158
    %v237 = vpop.f32.mrf.mxu0
    %v238 = vadd.f32 0.0, %v237
    %239 = vmatmul.f32.gmra.mxu0 %v159
    %v240 = vpop.f32.mrf.mxu0
    %v241 = vadd.f32 0.0, %v240
    %242 = vmatmul.f32.gmra.mxu0 %v160
    %v243 = vpop.f32.mrf.mxu0
    %v244 = vadd.f32 0.0, %v243
    %245 = vmatmul.f32.gmra.mxu0 %v161
    %v246 = vpop.f32.mrf.mxu0
    %v247 = vadd.f32 0.0, %v246
    %248 = vmatmul.f32.gmra.mxu0 %v162
    %v249 = vpop.f32.mrf.mxu0
    %v250 = vadd.f32 0.0, %v249
    %251 = vmatmul.f32.gmra.mxu0 %v163
    %v252 = vpop.f32.mrf.mxu0
    %v253 = vadd.f32 0.0, %v252
    %254 = vmatmul.f32.gmra.mxu0 %v164
    %v255 = vpop.f32.mrf.mxu0
    %v256 = vadd.f32 0.0, %v255
    %257 = vmatmul.f32.gmra.mxu0 %v165
    %v258 = vpop.f32.mrf.mxu0
    %v259 = vadd.f32 0.0, %v258
    %260 = vmatmul.f32.gmra.mxu0 %v166
    %v261 = vpop.f32.mrf.mxu0
    %v262 = vadd.f32 0.0, %v261
    %263 = vmatmul.f32.gmra.mxu0 %v167
    %v264 = vpop.f32.mrf.mxu0
    %v265 = vadd.f32 0.0, %v264
    %266 = vmatmul.f32.gmra.mxu0 %v168
    %v267 = vpop.f32.mrf.mxu0
    %v268 = vadd.f32 0.0, %v267
    %269 = vmatmul.f32.gmra.mxu0 %v169
    %v270 = vpop.f32.mrf.mxu0
    %v271 = vadd.f32 0.0, %v270
    %272 = vmatmul.f32.gmra.mxu0 %v170
    %v273 = vpop.f32.mrf.mxu0
    %v274 = vadd.f32 0.0, %v273
    %275 = vmatmul.f32.gmra.mxu0 %v171
    %v276 = vpop.f32.mrf.mxu0
    %v277 = vadd.f32 0.0, %v276
    %278 = vmatmul.f32.gmra.mxu0 %v172
    %v279 = vpop.f32.mrf.mxu0
    %v280 = vadd.f32 0.0, %v279
    %281 = vmatmul.f32.gmra.mxu0 %v173
    %v282 = vpop.f32.mrf.mxu0
    %v283 = vadd.f32 0.0, %v282
    %284 = vmatmul.f32.gmra.mxu0 %v174
    %v285 = vpop.f32.mrf.mxu0
    %v286 = vadd.f32 0.0, %v285
    %287 = vmatmul.f32.gmra.mxu0 %v175
    %v288 = vpop.f32.mrf.mxu0
    %v289 = vadd.f32 0.0, %v288
    %290 = vmatmul.f32.gmra.mxu0 %v176
    %v291 = vpop.f32.mrf.mxu0
    %v292 = vadd.f32 0.0, %v291
    %293 = vmatmul.f32.gmra.mxu0 %v177
    %v294 = vpop.f32.mrf.mxu0
    %v295 = vadd.f32 0.0, %v294
    %296 = vmatmul.f32.gmra.mxu0 %v178
    %v297 = vpop.f32.mrf.mxu0
    %v298 = vadd.f32 0.0, %v297
    %299 = vmatmul.f32.gmra.mxu0 %v179
    %v300 = vpop.f32.mrf.mxu0
    %v301 = vadd.f32 0.0, %v300
    %302 = vmatmul.f32.gmra.mxu0 %v180
    %v303 = vpop.f32.mrf.mxu0
    %v304 = vadd.f32 0.0, %v303
    %305 = vmatmul.f32.gmra.mxu0 %v181
    %v306 = vpop.f32.mrf.mxu0
    %v307 = vadd.f32 0.0, %v306
    %308 = vmatmul.f32.gmra.mxu0 %v182
    %v309 = vpop.f32.mrf.mxu0
    %v310 = vadd.f32 0.0, %v309
    %311 = vdwg.mxu0
    %v312 = vld [vmem:[%s3] sm:$0x1]
    %v314 = vperm.slane %v312, 0
    %316 = vmatpush.msra.mxu0 %v262
    %317 = vmatpush.msra.mxu0 %v259
    %318 = vmatpush.msra.mxu0 %v256
    %319 = vmatpush.msra.mxu0 %v253
    %320 = vmatpush.msra.mxu0 %v250
    %321 = vmatpush.msra.mxu0 %v247
    %322 = vmatpush.msra.mxu0 %v244
    %323 = vmatpush.msra.mxu0 %v241
    %324 = vmatpush.msra.mxu0 %v238
    %325 = vmatpush.msra.mxu0 %v235
    %326 = vmatpush.msra.mxu0 %v232
    %327 = vmatpush.msra.mxu0 %v229
    %328 = vmatpush.msra.mxu0 %v226
    %329 = vmatpush.msra.mxu0 %v223
    %330 = vmatpush.msra.mxu0 %v220
    %331 = vmatpush.msra.mxu0 %v217
    %332 = vmatmul.f32.gmra.mxu0 %v87
    %v333 = vpop.f32.mrf.mxu0
    %v334 = vadd.f32 %v314, %v333
    %335 = vmatmul.f32.gmra.mxu0 %v89
    %v336 = vpop.f32.mrf.mxu0
    %v337 = vadd.f32 %v314, %v336
    %338 = vmatmul.f32.gmra.mxu0 %v91
    %v339 = vpop.f32.mrf.mxu0
    %v340 = vadd.f32 %v314, %v339
    %341 = vmatmul.f32.gmra.mxu0 %v93
    %v342 = vpop.f32.mrf.mxu0
    %v343 = vadd.f32 %v314, %v342
    %344 = vmatmul.f32.gmra.mxu0 %v95
    %v345 = vpop.f32.mrf.mxu0
    %v346 = vadd.f32 %v314, %v345
    %347 = vmatmul.f32.gmra.mxu0 %v97
    %v348 = vpop.f32.mrf.mxu0
    %v349 = vadd.f32 %v314, %v348
    %350 = vmatmul.f32.gmra.mxu0 %v99
    %v351 = vpop.f32.mrf.mxu0
    %v352 = vadd.f32 %v314, %v351
    %353 = vmatmul.f32.gmra.mxu0 %v101
    %v354 = vpop.f32.mrf.mxu0
    %v355 = vadd.f32 %v314, %v354
    %356 = vmatmul.f32.gmra.mxu0 %v103
    %v357 = vpop.f32.mrf.mxu0
    %v358 = vadd.f32 %v314, %v357
    %359 = vmatmul.f32.gmra.mxu0 %v105
    %v360 = vpop.f32.mrf.mxu0
    %v361 = vadd.f32 %v314, %v360
    %362 = vmatmul.f32.gmra.mxu0 %v107
    %v363 = vpop.f32.mrf.mxu0
    %v364 = vadd.f32 %v314, %v363
    %365 = vmatmul.f32.gmra.mxu0 %v109
    %v366 = vpop.f32.mrf.mxu0
    %v367 = vadd.f32 %v314, %v366
    %368 = vmatmul.f32.gmra.mxu0 %v111
    %v369 = vpop.f32.mrf.mxu0
    %v370 = vadd.f32 %v314, %v369
    %371 = vmatmul.f32.gmra.mxu0 %v113
    %v372 = vpop.f32.mrf.mxu0
    %v373 = vadd.f32 %v314, %v372
    %374 = vmatmul.f32.gmra.mxu0 %v115
    %v375 = vpop.f32.mrf.mxu0
    %v376 = vadd.f32 %v314, %v375
    %377 = vmatmul.f32.gmra.mxu0 %v117
    %v378 = vpop.f32.mrf.mxu0
    %v379 = vadd.f32 %v314, %v378
    %380 = vmatmul.f32.gmra.mxu0 %v119
    %v381 = vpop.f32.mrf.mxu0
    %v382 = vadd.f32 %v314, %v381
    %383 = vmatmul.f32.gmra.mxu0 %v121
    %v384 = vpop.f32.mrf.mxu0
    %v385 = vadd.f32 %v314, %v384
    %386 = vmatmul.f32.gmra.mxu0 %v123
    %v387 = vpop.f32.mrf.mxu0
    %v388 = vadd.f32 %v314, %v387
    %389 = vmatmul.f32.gmra.mxu0 %v125
    %v390 = vpop.f32.mrf.mxu0
    %v391 = vadd.f32 %v314, %v390
    %392 = vmatmul.f32.gmra.mxu0 %v127
    %v393 = vpop.f32.mrf.mxu0
    %v394 = vadd.f32 %v314, %v393
    %395 = vmatmul.f32.gmra.mxu0 %v129
    %v396 = vpop.f32.mrf.mxu0
    %v397 = vadd.f32 %v314, %v396
    %398 = vmatmul.f32.gmra.mxu0 %v131
    %v399 = vpop.f32.mrf.mxu0
    %v400 = vadd.f32 %v314, %v399
    %401 = vmatmul.f32.gmra.mxu0 %v133
    %v402 = vpop.f32.mrf.mxu0
    %v403 = vadd.f32 %v314, %v402
    %404 = vmatmul.f32.gmra.mxu0 %v135
    %v405 = vpop.f32.mrf.mxu0
    %v406 = vadd.f32 %v314, %v405
    %407 = vmatmul.f32.gmra.mxu0 %v137
    %v408 = vpop.f32.mrf.mxu0
    %v409 = vadd.f32 %v314, %v408
    %410 = vmatmul.f32.gmra.mxu0 %v139
    %v411 = vpop.f32.mrf.mxu0
    %v412 = vadd.f32 %v314, %v411
    %413 = vmatmul.f32.gmra.mxu0 %v141
    %v414 = vpop.f32.mrf.mxu0
    %v415 = vadd.f32 %v314, %v414
    %416 = vmatmul.f32.gmra.mxu0 %v143
    %v417 = vpop.f32.mrf.mxu0
    %v418 = vadd.f32 %v314, %v417
    %419 = vmatmul.f32.gmra.mxu0 %v145
    %v420 = vpop.f32.mrf.mxu0
    %v421 = vadd.f32 %v314, %v420
    %422 = vmatmul.f32.gmra.mxu0 %v147
    %v423 = vpop.f32.mrf.mxu0
    %v424 = vadd.f32 %v314, %v423
    %425 = vmatmul.f32.gmra.mxu0 %v149
    %v426 = vpop.f32.mrf.mxu0
    %v427 = vadd.f32 %v314, %v426
    %428 = vdwg.mxu0
    %429 = vmatpush.msra.mxu0 %v310
    %430 = vmatpush.msra.mxu0 %v307
    %431 = vmatpush.msra.mxu0 %v304
    %432 = vmatpush.msra.mxu0 %v301
    %433 = vmatpush.msra.mxu0 %v298
    %434 = vmatpush.msra.mxu0 %v295
    %435 = vmatpush.msra.mxu0 %v292
    %436 = vmatpush.msra.mxu0 %v289
    %437 = vmatpush.msra.mxu0 %v286
    %438 = vmatpush.msra.mxu0 %v283
    %439 = vmatpush.msra.mxu0 %v280
    %440 = vmatpush.msra.mxu0 %v277
    %441 = vmatpush.msra.mxu0 %v274
    %442 = vmatpush.msra.mxu0 %v271
    %443 = vmatpush.msra.mxu0 %v268
    %444 = vmatpush.msra.mxu0 %v265
    %445 = vmatmul.f32.gmra.mxu0 %v88
    %v446 = vpop.f32.mrf.mxu0
    %v447 = vadd.f32 %v334, %v446
    %448 = vmatmul.f32.gmra.mxu0 %v90
    %v449 = vpop.f32.mrf.mxu0
    %v450 = vadd.f32 %v337, %v449
    %451 = vmatmul.f32.gmra.mxu0 %v92
    %v452 = vpop.f32.mrf.mxu0
    %v453 = vadd.f32 %v340, %v452
    %454 = vmatmul.f32.gmra.mxu0 %v94
    %v455 = vpop.f32.mrf.mxu0
    %v456 = vadd.f32 %v343, %v455
    %457 = vmatmul.f32.gmra.mxu0 %v96
    %v458 = vpop.f32.mrf.mxu0
    %v459 = vadd.f32 %v346, %v458
    %460 = vmatmul.f32.gmra.mxu0 %v98
    %v461 = vpop.f32.mrf.mxu0
    %v462 = vadd.f32 %v349, %v461
    %463 = vmatmul.f32.gmra.mxu0 %v100
    %v464 = vpop.f32.mrf.mxu0
    %v465 = vadd.f32 %v352, %v464
    %466 = vmatmul.f32.gmra.mxu0 %v102
    %v467 = vpop.f32.mrf.mxu0
    %v468 = vadd.f32 %v355, %v467
    %469 = vmatmul.f32.gmra.mxu0 %v104
    %v470 = vpop.f32.mrf.mxu0
    %v471 = vadd.f32 %v358, %v470
    %472 = vmatmul.f32.gmra.mxu0 %v106
    %v473 = vpop.f32.mrf.mxu0
    %v474 = vadd.f32 %v361, %v473
    %475 = vmatmul.f32.gmra.mxu0 %v108
    %v476 = vpop.f32.mrf.mxu0
    %v477 = vadd.f32 %v364, %v476
    %478 = vmatmul.f32.gmra.mxu0 %v110
    %v479 = vpop.f32.mrf.mxu0
    %v480 = vadd.f32 %v367, %v479
    %481 = vmatmul.f32.gmra.mxu0 %v112
    %v482 = vpop.f32.mrf.mxu0
    %v483 = vadd.f32 %v370, %v482
    %484 = vmatmul.f32.gmra.mxu0 %v114
    %v485 = vpop.f32.mrf.mxu0
    %v486 = vadd.f32 %v373, %v485
    %487 = vmatmul.f32.gmra.mxu0 %v116
    %v488 = vpop.f32.mrf.mxu0
    %v489 = vadd.f32 %v376, %v488
    %490 = vmatmul.f32.gmra.mxu0 %v118
    %v491 = vpop.f32.mrf.mxu0
    %v492 = vadd.f32 %v379, %v491
    %493 = vmatmul.f32.gmra.mxu0 %v120
    %v494 = vpop.f32.mrf.mxu0
    %v495 = vadd.f32 %v382, %v494
    %496 = vmatmul.f32.gmra.mxu0 %v122
    %v497 = vpop.f32.mrf.mxu0
    %v498 = vadd.f32 %v385, %v497
    %499 = vmatmul.f32.gmra.mxu0 %v124
    %v500 = vpop.f32.mrf.mxu0
    %v501 = vadd.f32 %v388, %v500
    %502 = vmatmul.f32.gmra.mxu0 %v126
    %v503 = vpop.f32.mrf.mxu0
    %v504 = vadd.f32 %v391, %v503
    %505 = vmatmul.f32.gmra.mxu0 %v128
    %v506 = vpop.f32.mrf.mxu0
    %v507 = vadd.f32 %v394, %v506
    %508 = vmatmul.f32.gmra.mxu0 %v130
    %v509 = vpop.f32.mrf.mxu0
    %v510 = vadd.f32 %v397, %v509
    %511 = vmatmul.f32.gmra.mxu0 %v132
    %v512 = vpop.f32.mrf.mxu0
    %v513 = vadd.f32 %v400, %v512
    %514 = vmatmul.f32.gmra.mxu0 %v134
    %v515 = vpop.f32.mrf.mxu0
    %v516 = vadd.f32 %v403, %v515
    %517 = vmatmul.f32.gmra.mxu0 %v136
    %v518 = vpop.f32.mrf.mxu0
    %v519 = vadd.f32 %v406, %v518
    %520 = vmatmul.f32.gmra.mxu0 %v138
    %v521 = vpop.f32.mrf.mxu0
    %v522 = vadd.f32 %v409, %v521
    %523 = vmatmul.f32.gmra.mxu0 %v140
    %v524 = vpop.f32.mrf.mxu0
    %v525 = vadd.f32 %v412, %v524
    %526 = vmatmul.f32.gmra.mxu0 %v142
    %v527 = vpop.f32.mrf.mxu0
    %v528 = vadd.f32 %v415, %v527
    %529 = vmatmul.f32.gmra.mxu0 %v144
    %v530 = vpop.f32.mrf.mxu0
    %v531 = vadd.f32 %v418, %v530
    %532 = vmatmul.f32.gmra.mxu0 %v146
    %v533 = vpop.f32.mrf.mxu0
    %v534 = vadd.f32 %v421, %v533
    %535 = vmatmul.f32.gmra.mxu0 %v148
    %v536 = vpop.f32.mrf.mxu0
    %v537 = vadd.f32 %v424, %v536
    %538 = vmatmul.f32.gmra.mxu0 %v150
    %v539 = vpop.f32.mrf.mxu0
    %v540 = vadd.f32 %v427, %v539
    %541 = vdwg.mxu0
    %v542 = vmax.f32 %v447, 0.0
    %v543 = vmax.f32 %v450, 0.0
    %v544 = vmax.f32 %v453, 0.0
    %v545 = vmax.f32 %v456, 0.0
    %v546 = vmax.f32 %v459, 0.0
    %v547 = vmax.f32 %v462, 0.0
    %v548 = vmax.f32 %v465, 0.0
    %v549 = vmax.f32 %v468, 0.0
    %v550 = vmax.f32 %v471, 0.0
    %v551 = vmax.f32 %v474, 0.0
    %v552 = vmax.f32 %v477, 0.0
    %v553 = vmax.f32 %v480, 0.0
    %v554 = vmax.f32 %v483, 0.0
    %v555 = vmax.f32 %v486, 0.0
    %v556 = vmax.f32 %v489, 0.0
    %v557 = vmax.f32 %v492, 0.0
    %v558 = vmax.f32 %v495, 0.0
    %v559 = vmax.f32 %v498, 0.0
    %v560 = vmax.f32 %v501, 0.0
    %v561 = vmax.f32 %v504, 0.0
    %v562 = vmax.f32 %v507, 0.0
    %v563 = vmax.f32 %v510, 0.0
    %v564 = vmax.f32 %v513, 0.0
    %v565 = vmax.f32 %v516, 0.0
    %v566 = vmax.f32 %v519, 0.0
    %v567 = vmax.f32 %v522, 0.0
    %v568 = vmax.f32 %v525, 0.0
    %v569 = vmax.f32 %v528, 0.0
    %v570 = vmax.f32 %v531, 0.0
    %v571 = vmax.f32 %v534, 0.0
    %v572 = vmax.f32 %v537, 0.0
    %v573 = vmax.f32 %v540, 0.0
    %v574 = vld [vmem:[#allocation8] sm:$0xff]
    %v575 = vld [vmem:[#allocation8 + $0x8] sm:$0xff]
    %v576 = vld [vmem:[#allocation8 + $0x10] sm:$0xff]
    %v577 = vld [vmem:[#allocation8 + $0x18] sm:$0xff]
    %v578 = vld [vmem:[#allocation8 + $0x20] sm:$0xff]
    %v579 = vld [vmem:[#allocation8 + $0x28] sm:$0xff]
    %v580 = vld [vmem:[#allocation8 + $0x30] sm:$0xff]
    %v581 = vld [vmem:[#allocation8 + $0x38] sm:$0xff]
    %v582 = vld [vmem:[#allocation8 + $0x40] sm:$0xff]
    %v583 = vld [vmem:[#allocation8 + $0x48] sm:$0xff]
    %v584 = vld [vmem:[#allocation8 + $0x50] sm:$0xff]
    %v585 = vld [vmem:[#allocation8 + $0x58] sm:$0xff]
    %v586 = vld [vmem:[#allocation8 + $0x60] sm:$0xff]
    %v587 = vld [vmem:[#allocation8 + $0x68] sm:$0xff]
    %v588 = vld [vmem:[#allocation8 + $0x70] sm:$0xff]
    %v589 = vld [vmem:[#allocation8 + $0x78] sm:$0xff]
    %590 = vmatpush.msra.mxu0 %v589
    %591 = vmatpush.msra.mxu0 %v588
    %592 = vmatpush.msra.mxu0 %v587
    %593 = vmatpush.msra.mxu0 %v586
    %594 = vmatpush.msra.mxu0 %v585
    %595 = vmatpush.msra.mxu0 %v584
    %596 = vmatpush.msra.mxu0 %v583
    %597 = vmatpush.msra.mxu0 %v582
    %598 = vmatpush.msra.mxu0 %v581
    %599 = vmatpush.msra.mxu0 %v580
    %600 = vmatpush.msra.mxu0 %v579
    %601 = vmatpush.msra.mxu0 %v578
    %602 = vmatpush.msra.mxu0 %v577
    %603 = vmatpush.msra.mxu0 %v576
    %604 = vmatpush.msra.mxu0 %v575
    %605 = vmatpush.msra.mxu0 %v574
    %606 = vmatmul.f32.gmra.mxu0 %v542
    %v607 = vpop.f32.mrf.mxu0
    %v608 = vadd.f32 0.0, %v607
    %609 = vmatmul.f32.gmra.mxu0 %v543
    %v610 = vpop.f32.mrf.mxu0
    %v611 = vadd.f32 0.0, %v610
    %612 = vmatmul.f32.gmra.mxu0 %v544
    %v613 = vpop.f32.mrf.mxu0
    %v614 = vadd.f32 0.0, %v613
    %615 = vmatmul.f32.gmra.mxu0 %v545
    %v616 = vpop.f32.mrf.mxu0
    %v617 = vadd.f32 0.0, %v616
    %618 = vmatmul.f32.gmra.mxu0 %v546
    %v619 = vpop.f32.mrf.mxu0
    %v620 = vadd.f32 0.0, %v619
    %621 = vmatmul.f32.gmra.mxu0 %v547
    %v622 = vpop.f32.mrf.mxu0
    %v623 = vadd.f32 0.0, %v622
    %624 = vmatmul.f32.gmra.mxu0 %v548
    %v625 = vpop.f32.mrf.mxu0
    %v626 = vadd.f32 0.0, %v625
    %627 = vmatmul.f32.gmra.mxu0 %v549
    %v628 = vpop.f32.mrf.mxu0
    %v629 = vadd.f32 0.0, %v628
    %630 = vmatmul.f32.gmra.mxu0 %v550
    %v631 = vpop.f32.mrf.mxu0
    %v632 = vadd.f32 0.0, %v631
    %633 = vmatmul.f32.gmra.mxu0 %v551
    %v634 = vpop.f32.mrf.mxu0
    %v635 = vadd.f32 0.0, %v634
    %636 = vmatmul.f32.gmra.mxu0 %v552
    %v637 = vpop.f32.mrf.mxu0
    %v638 = vadd.f32 0.0, %v637
    %639 = vmatmul.f32.gmra.mxu0 %v553
    %v640 = vpop.f32.mrf.mxu0
    %v641 = vadd.f32 0.0, %v640
    %642 = vmatmul.f32.gmra.mxu0 %v554
    %v643 = vpop.f32.mrf.mxu0
    %v644 = vadd.f32 0.0, %v643
    %645 = vmatmul.f32.gmra.mxu0 %v555
    %v646 = vpop.f32.mrf.mxu0
    %v647 = vadd.f32 0.0, %v646
    %648 = vmatmul.f32.gmra.mxu0 %v556
    %v649 = vpop.f32.mrf.mxu0
    %v650 = vadd.f32 0.0, %v649
    %651 = vmatmul.f32.gmra.mxu0 %v557
    %v652 = vpop.f32.mrf.mxu0
    %v653 = vadd.f32 0.0, %v652
    %654 = vmatmul.f32.gmra.mxu0 %v558
    %v655 = vpop.f32.mrf.mxu0
    %v656 = vadd.f32 0.0, %v655
    %657 = vmatmul.f32.gmra.mxu0 %v559
    %v658 = vpop.f32.mrf.mxu0
    %v659 = vadd.f32 0.0, %v658
    %660 = vmatmul.f32.gmra.mxu0 %v560
    %v661 = vpop.f32.mrf.mxu0
    %v662 = vadd.f32 0.0, %v661
    %663 = vmatmul.f32.gmra.mxu0 %v561
    %v664 = vpop.f32.mrf.mxu0
    %v665 = vadd.f32 0.0, %v664
    %666 = vmatmul.f32.gmra.mxu0 %v562
    %v667 = vpop.f32.mrf.mxu0
    %v668 = vadd.f32 0.0, %v667
    %669 = vmatmul.f32.gmra.mxu0 %v563
    %v670 = vpop.f32.mrf.mxu0
    %v671 = vadd.f32 0.0, %v670
    %672 = vmatmul.f32.gmra.mxu0 %v564
    %v673 = vpop.f32.mrf.mxu0
    %v674 = vadd.f32 0.0, %v673
    %675 = vmatmul.f32.gmra.mxu0 %v565
    %v676 = vpop.f32.mrf.mxu0
    %v677 = vadd.f32 0.0, %v676
    %678 = vmatmul.f32.gmra.mxu0 %v566
    %v679 = vpop.f32.mrf.mxu0
    %v680 = vadd.f32 0.0, %v679
    %681 = vmatmul.f32.gmra.mxu0 %v567
    %v682 = vpop.f32.mrf.mxu0
    %v683 = vadd.f32 0.0, %v682
    %684 = vmatmul.f32.gmra.mxu0 %v568
    %v685 = vpop.f32.mrf.mxu0
    %v686 = vadd.f32 0.0, %v685
    %687 = vmatmul.f32.gmra.mxu0 %v569
    %v688 = vpop.f32.mrf.mxu0
    %v689 = vadd.f32 0.0, %v688
    %690 = vmatmul.f32.gmra.mxu0 %v570
    %v691 = vpop.f32.mrf.mxu0
    %v692 = vadd.f32 0.0, %v691
    %693 = vmatmul.f32.gmra.mxu0 %v571
    %v694 = vpop.f32.mrf.mxu0
    %v695 = vadd.f32 0.0, %v694
    %696 = vmatmul.f32.gmra.mxu0 %v572
    %v697 = vpop.f32.mrf.mxu0
    %v698 = vadd.f32 0.0, %v697
    %699 = vmatmul.f32.gmra.mxu0 %v573
    %v700 = vpop.f32.mrf.mxu0
    %v701 = vadd.f32 0.0, %v700
    %702 = vdwg.mxu0
    %v703 = vld [vmem:[%s5] sm:$0x1]
    %v705 = vperm.slane %v703, 0
    %707 = vmatpush.msra.mxu0 %v653
    %708 = vmatpush.msra.mxu0 %v650
    %709 = vmatpush.msra.mxu0 %v647
    %710 = vmatpush.msra.mxu0 %v644
    %711 = vmatpush.msra.mxu0 %v641
    %712 = vmatpush.msra.mxu0 %v638
    %713 = vmatpush.msra.mxu0 %v635
    %714 = vmatpush.msra.mxu0 %v632
    %715 = vmatpush.msra.mxu0 %v629
    %716 = vmatpush.msra.mxu0 %v626
    %717 = vmatpush.msra.mxu0 %v623
    %718 = vmatpush.msra.mxu0 %v620
    %719 = vmatpush.msra.mxu0 %v617
    %720 = vmatpush.msra.mxu0 %v614
    %721 = vmatpush.msra.mxu0 %v611
    %722 = vmatpush.msra.mxu0 %v608
    %723 = vmatmul.f32.gmra.mxu0 %v87
    %v724 = vpop.f32.mrf.mxu0
    %v725 = vadd.f32 %v705, %v724
    %726 = vmatmul.f32.gmra.mxu0 %v89
    %v727 = vpop.f32.mrf.mxu0
    %v728 = vadd.f32 %v705, %v727
    %729 = vmatmul.f32.gmra.mxu0 %v91
    %v730 = vpop.f32.mrf.mxu0
    %v731 = vadd.f32 %v705, %v730
    %732 = vmatmul.f32.gmra.mxu0 %v93
    %v733 = vpop.f32.mrf.mxu0
    %v734 = vadd.f32 %v705, %v733
    %735 = vmatmul.f32.gmra.mxu0 %v95
    %v736 = vpop.f32.mrf.mxu0
    %v737 = vadd.f32 %v705, %v736
    %738 = vmatmul.f32.gmra.mxu0 %v97
    %v739 = vpop.f32.mrf.mxu0
    %v740 = vadd.f32 %v705, %v739
    %741 = vmatmul.f32.gmra.mxu0 %v99
    %v742 = vpop.f32.mrf.mxu0
    %v743 = vadd.f32 %v705, %v742
    %744 = vmatmul.f32.gmra.mxu0 %v101
    %v745 = vpop.f32.mrf.mxu0
    %v746 = vadd.f32 %v705, %v745
    %747 = vmatmul.f32.gmra.mxu0 %v103
    %v748 = vpop.f32.mrf.mxu0
    %v749 = vadd.f32 %v705, %v748
    %750 = vmatmul.f32.gmra.mxu0 %v105
    %v751 = vpop.f32.mrf.mxu0
    %v752 = vadd.f32 %v705, %v751
    %753 = vmatmul.f32.gmra.mxu0 %v107
    %v754 = vpop.f32.mrf.mxu0
    %v755 = vadd.f32 %v705, %v754
    %756 = vmatmul.f32.gmra.mxu0 %v109
    %v757 = vpop.f32.mrf.mxu0
    %v758 = vadd.f32 %v705, %v757
    %759 = vmatmul.f32.gmra.mxu0 %v111
    %v760 = vpop.f32.mrf.mxu0
    %v761 = vadd.f32 %v705, %v760
    %762 = vmatmul.f32.gmra.mxu0 %v113
    %v763 = vpop.f32.mrf.mxu0
    %v764 = vadd.f32 %v705, %v763
    %765 = vmatmul.f32.gmra.mxu0 %v115
    %v766 = vpop.f32.mrf.mxu0
    %v767 = vadd.f32 %v705, %v766
    %768 = vmatmul.f32.gmra.mxu0 %v117
    %v769 = vpop.f32.mrf.mxu0
    %v770 = vadd.f32 %v705, %v769
    %771 = vmatmul.f32.gmra.mxu0 %v119
    %v772 = vpop.f32.mrf.mxu0
    %v773 = vadd.f32 %v705, %v772
    %774 = vmatmul.f32.gmra.mxu0 %v121
    %v775 = vpop.f32.mrf.mxu0
    %v776 = vadd.f32 %v705, %v775
    %777 = vmatmul.f32.gmra.mxu0 %v123
    %v778 = vpop.f32.mrf.mxu0
    %v779 = vadd.f32 %v705, %v778
    %780 = vmatmul.f32.gmra.mxu0 %v125
    %v781 = vpop.f32.mrf.mxu0
    %v782 = vadd.f32 %v705, %v781
    %783 = vmatmul.f32.gmra.mxu0 %v127
    %v784 = vpop.f32.mrf.mxu0
    %v785 = vadd.f32 %v705, %v784
    %786 = vmatmul.f32.gmra.mxu0 %v129
    %v787 = vpop.f32.mrf.mxu0
    %v788 = vadd.f32 %v705, %v787
    %789 = vmatmul.f32.gmra.mxu0 %v131
    %v790 = vpop.f32.mrf.mxu0
    %v791 = vadd.f32 %v705, %v790
    %792 = vmatmul.f32.gmra.mxu0 %v133
    %v793 = vpop.f32.mrf.mxu0
    %v794 = vadd.f32 %v705, %v793
    %795 = vmatmul.f32.gmra.mxu0 %v135
    %v796 = vpop.f32.mrf.mxu0
    %v797 = vadd.f32 %v705, %v796
    %798 = vmatmul.f32.gmra.mxu0 %v137
    %v799 = vpop.f32.mrf.mxu0
    %v800 = vadd.f32 %v705, %v799
    %801 = vmatmul.f32.gmra.mxu0 %v139
    %v802 = vpop.f32.mrf.mxu0
    %v803 = vadd.f32 %v705, %v802
    %804 = vmatmul.f32.gmra.mxu0 %v141
    %v805 = vpop.f32.mrf.mxu0
    %v806 = vadd.f32 %v705, %v805
    %807 = vmatmul.f32.gmra.mxu0 %v143
    %v808 = vpop.f32.mrf.mxu0
    %v809 = vadd.f32 %v705, %v808
    %810 = vmatmul.f32.gmra.mxu0 %v145
    %v811 = vpop.f32.mrf.mxu0
    %v812 = vadd.f32 %v705, %v811
    %813 = vmatmul.f32.gmra.mxu0 %v147
    %v814 = vpop.f32.mrf.mxu0
    %v815 = vadd.f32 %v705, %v814
    %816 = vmatmul.f32.gmra.mxu0 %v149
    %v817 = vpop.f32.mrf.mxu0
    %v818 = vadd.f32 %v705, %v817
    %819 = vdwg.mxu0
    %820 = vmatpush.msra.mxu0 %v701
    %821 = vmatpush.msra.mxu0 %v698
    %822 = vmatpush.msra.mxu0 %v695
    %823 = vmatpush.msra.mxu0 %v692
    %824 = vmatpush.msra.mxu0 %v689
    %825 = vmatpush.msra.mxu0 %v686
    %826 = vmatpush.msra.mxu0 %v683
    %827 = vmatpush.msra.mxu0 %v680
    %828 = vmatpush.msra.mxu0 %v677
    %829 = vmatpush.msra.mxu0 %v674
    %830 = vmatpush.msra.mxu0 %v671
    %831 = vmatpush.msra.mxu0 %v668
    %832 = vmatpush.msra.mxu0 %v665
    %833 = vmatpush.msra.mxu0 %v662
    %834 = vmatpush.msra.mxu0 %v659
    %835 = vmatpush.msra.mxu0 %v656
    %836 = vmatmul.f32.gmra.mxu0 %v88
    %v837 = vpop.f32.mrf.mxu0
    %v838 = vadd.f32 %v725, %v837
    %839 = vmatmul.f32.gmra.mxu0 %v90
    %v840 = vpop.f32.mrf.mxu0
    %v841 = vadd.f32 %v728, %v840
    %842 = vmatmul.f32.gmra.mxu0 %v92
    %v843 = vpop.f32.mrf.mxu0
    %v844 = vadd.f32 %v731, %v843
    %845 = vmatmul.f32.gmra.mxu0 %v94
    %v846 = vpop.f32.mrf.mxu0
    %v847 = vadd.f32 %v734, %v846
    %848 = vmatmul.f32.gmra.mxu0 %v96
    %v849 = vpop.f32.mrf.mxu0
    %v850 = vadd.f32 %v737, %v849
    %851 = vmatmul.f32.gmra.mxu0 %v98
    %v852 = vpop.f32.mrf.mxu0
    %v853 = vadd.f32 %v740, %v852
    %854 = vmatmul.f32.gmra.mxu0 %v100
    %v855 = vpop.f32.mrf.mxu0
    %v856 = vadd.f32 %v743, %v855
    %857 = vmatmul.f32.gmra.mxu0 %v102
    %v858 = vpop.f32.mrf.mxu0
    %v859 = vadd.f32 %v746, %v858
    %860 = vmatmul.f32.gmra.mxu0 %v104
    %v861 = vpop.f32.mrf.mxu0
    %v862 = vadd.f32 %v749, %v861
    %863 = vmatmul.f32.gmra.mxu0 %v106
    %v864 = vpop.f32.mrf.mxu0
    %v865 = vadd.f32 %v752, %v864
    %866 = vmatmul.f32.gmra.mxu0 %v108
    %v867 = vpop.f32.mrf.mxu0
    %v868 = vadd.f32 %v755, %v867
    %869 = vmatmul.f32.gmra.mxu0 %v110
    %v870 = vpop.f32.mrf.mxu0
    %v871 = vadd.f32 %v758, %v870
    %872 = vmatmul.f32.gmra.mxu0 %v112
    %v873 = vpop.f32.mrf.mxu0
    %v874 = vadd.f32 %v761, %v873
    %875 = vmatmul.f32.gmra.mxu0 %v114
    %v876 = vpop.f32.mrf.mxu0
    %v877 = vadd.f32 %v764, %v876
    %878 = vmatmul.f32.gmra.mxu0 %v116
    %v879 = vpop.f32.mrf.mxu0
    %v880 = vadd.f32 %v767, %v879
    %881 = vmatmul.f32.gmra.mxu0 %v118
    %v882 = vpop.f32.mrf.mxu0
    %v883 = vadd.f32 %v770, %v882
    %884 = vmatmul.f32.gmra.mxu0 %v120
    %v885 = vpop.f32.mrf.mxu0
    %v886 = vadd.f32 %v773, %v885
    %887 = vmatmul.f32.gmra.mxu0 %v122
    %v888 = vpop.f32.mrf.mxu0
    %v889 = vadd.f32 %v776, %v888
    %890 = vmatmul.f32.gmra.mxu0 %v124
    %v891 = vpop.f32.mrf.mxu0
    %v892 = vadd.f32 %v779, %v891
    %893 = vmatmul.f32.gmra.mxu0 %v126
    %v894 = vpop.f32.mrf.mxu0
    %v895 = vadd.f32 %v782, %v894
    %896 = vmatmul.f32.gmra.mxu0 %v128
    %v897 = vpop.f32.mrf.mxu0
    %v898 = vadd.f32 %v785, %v897
    %899 = vmatmul.f32.gmra.mxu0 %v130
    %v900 = vpop.f32.mrf.mxu0
    %v901 = vadd.f32 %v788, %v900
    %902 = vmatmul.f32.gmra.mxu0 %v132
    %v903 = vpop.f32.mrf.mxu0
    %v904 = vadd.f32 %v791, %v903
    %905 = vmatmul.f32.gmra.mxu0 %v134
    %v906 = vpop.f32.mrf.mxu0
    %v907 = vadd.f32 %v794, %v906
    %908 = vmatmul.f32.gmra.mxu0 %v136
    %v909 = vpop.f32.mrf.mxu0
    %v910 = vadd.f32 %v797, %v909
    %911 = vmatmul.f32.gmra.mxu0 %v138
    %v912 = vpop.f32.mrf.mxu0
    %v913 = vadd.f32 %v800, %v912
    %914 = vmatmul.f32.gmra.mxu0 %v140
    %v915 = vpop.f32.mrf.mxu0
    %v916 = vadd.f32 %v803, %v915
    %917 = vmatmul.f32.gmra.mxu0 %v142
    %v918 = vpop.f32.mrf.mxu0
    %v919 = vadd.f32 %v806, %v918
    %920 = vmatmul.f32.gmra.mxu0 %v144
    %v921 = vpop.f32.mrf.mxu0
    %v922 = vadd.f32 %v809, %v921
    %923 = vmatmul.f32.gmra.mxu0 %v146
    %v924 = vpop.f32.mrf.mxu0
    %v925 = vadd.f32 %v812, %v924
    %926 = vmatmul.f32.gmra.mxu0 %v148
    %v927 = vpop.f32.mrf.mxu0
    %v928 = vadd.f32 %v815, %v927
    %929 = vmatmul.f32.gmra.mxu0 %v150
    %v930 = vpop.f32.mrf.mxu0
    %v931 = vadd.f32 %v818, %v930
    %932 = vdwg.mxu0
    %933 = vst [vmem:[#allocation10] sm:$0xff] %v838
    %934 = vst [vmem:[#allocation10 + $0x8] sm:$0xff] %v841
    %935 = vst [vmem:[#allocation10 + $0x10] sm:$0xff] %v844
    %936 = vst [vmem:[#allocation10 + $0x18] sm:$0xff] %v847
    %937 = vst [vmem:[#allocation10 + $0x20] sm:$0xff] %v850
    %938 = vst [vmem:[#allocation10 + $0x28] sm:$0xff] %v853
    %939 = vst [vmem:[#allocation10 + $0x30] sm:$0xff] %v856
    %940 = vst [vmem:[#allocation10 + $0x38] sm:$0xff] %v859
    %941 = vst [vmem:[#allocation10 + $0x40] sm:$0xff] %v862
    %942 = vst [vmem:[#allocation10 + $0x48] sm:$0xff] %v865
    %943 = vst [vmem:[#allocation10 + $0x50] sm:$0xff] %v868
    %944 = vst [vmem:[#allocation10 + $0x58] sm:$0xff] %v871
    %945 = vst [vmem:[#allocation10 + $0x60] sm:$0xff] %v874
    %946 = vst [vmem:[#allocation10 + $0x68] sm:$0xff] %v877
    %947 = vst [vmem:[#allocation10 + $0x70] sm:$0xff] %v880
    %948 = vst [vmem:[#allocation10 + $0x78] sm:$0xff] %v883
    %949 = vst [vmem:[#allocation10 + $0x80] sm:$0xff] %v886
    %950 = vst [vmem:[#allocation10 + $0x88] sm:$0xff] %v889
    %951 = vst [vmem:[#allocation10 + $0x90] sm:$0xff] %v892
    %952 = vst [vmem:[#allocation10 + $0x98] sm:$0xff] %v895
    %953 = vst [vmem:[#allocation10 + $0xa0] sm:$0xff] %v898
    %954 = vst [vmem:[#allocation10 + $0xa8] sm:$0xff] %v901
    %955 = vst [vmem:[#allocation10 + $0xb0] sm:$0xff] %v904
    %956 = vst [vmem:[#allocation10 + $0xb8] sm:$0xff] %v907
    %957 = vst [vmem:[#allocation10 + $0xc0] sm:$0xff] %v910
    %958 = vst [vmem:[#allocation10 + $0xc8] sm:$0xff] %v913
    %959 = vst [vmem:[#allocation10 + $0xd0] sm:$0xff] %v916
    %960 = vst [vmem:[#allocation10 + $0xd8] sm:$0xff] %v919
    %961 = vst [vmem:[#allocation10 + $0xe0] sm:$0xff] %v922
    %962 = vst [vmem:[#allocation10 + $0xe8] sm:$0xff] %v925
    %963 = vst [vmem:[#allocation10 + $0xf0] sm:$0xff] %v928
    %964 = vst [vmem:[#allocation10 + $0xf8] sm:$0xff] %v931
    // Predicated region
    $region42: #{tpu_custom_call.1} parent=1 // pred_check
      _
    $region43: #{tpu_custom_call.1} parent=1 // pred_check_branch
      %966 = sbr.rel (0) target = $region45
    $region44: #{tpu_custom_call.1} parent=1 // pred_region
      %968 = vsyncadd [#allocation4], 0
      %s969 = sshll.u32 [#allocation10], 4
      %s970 = int_to_ptr.vmem [resolvable:$true] %s969
      %s971 = sshll.u32 %s6, 4
      %s972 = int_to_ptr.hbm [resolvable:$true] %s971
      %977 = dma.vmem_to_hbm [thread:$0]  %s970, 4096, %s972, [#allocation4], 128, 128, 8
    $region45: #{tpu_custom_call.1} parent=1 // pred_fallthru
      _
    // Predicated region
    $region46: #{tpu_custom_call.1} parent=1 // pred_check
      _
    $region47: #{tpu_custom_call.1} parent=1 // pred_check_branch
      %979 = sbr.rel (0) target = $region49
    $region48: #{tpu_custom_call.1} parent=1 // pred_region
      %981 = dma.done [#allocation4], 4096
    $region49: #{tpu_custom_call.1} parent=1 // pred_fallthru
      _
    %982 = vsyncpa [#allocation3], 1
    %983 = vsyncpa [#allocation6], 1
    %984 = vsyncpa [#allocation9], 1
    %985 = vsyncpa [#allocation4], 1

</llo_original>
